<compile_context>
chip_gen: v7x
topology: tpu7x:2x2x1
jax: 0.10.0
libtpu: 0.0.40
codegen_flags: <defaults>
</compile_context>

<pallas_src>
import math

import numpy as np
import jax
import jax.numpy as jnp
from jax.experimental import pallas as pl
from jax.experimental.pallas import tpu as pltpu


def denormalize_kernel(x_ref, std_ref, mean_ref, o_ref):
    # Pure elementwise VPU work: one mul + one add per vreg. std/mean are
    # [1, feat] and broadcast over the sublane (row) axis.
    o_ref[...] = x_ref[...] * std_ref[...] + mean_ref[...]


def _round_up(n, m):
    return (n + m - 1) // m * m


# Sublane packing per element width (f32 -> 8, bf16 -> 16, int8/fp8 -> 32).
_SUBLANE = {4: 8, 2: 16, 1: 32}


def denormalize(x, std, mean, *, target_tile_bytes=2 << 20):
    """x: [..., size]; std, mean: [size]. Returns x * std + mean."""
    orig_shape = x.shape
    size = orig_shape[-1]
    dtype = x.dtype
    itemsize = jnp.dtype(dtype).itemsize
    sublane = _SUBLANE.get(itemsize, 8)

    std = std.astype(dtype)
    mean = mean.astype(dtype)

    x2 = x.reshape(-1, size)  # free row-major reshape
    rows, feat = x2.shape

    # Lane-densify small / non-multiple-of-128 feature sizes by folding k rows
    # into one (free row-major reshape); only the tiny std/mean vectors are
    # tiled. No padded copy of x is ever materialized in HBM.
    if feat % 128 != 0:
        k = 128 // math.gcd(feat, 128)
        if k > 1 and rows % k == 0:
            rows, feat = rows // k, feat * k
            x2 = x2.reshape(rows, feat)
            std = jnp.tile(std, (k,))
            mean = jnp.tile(mean, (k,))
    # If feat is still not a multiple of 128, the block last dim below equals
    # the full array dim (always legal); we eat masked stores on the boundary
    # vregs rather than paying an extra full HBM pass to pad x.

    std2 = std.reshape(1, feat)
    mean2 = mean.reshape(1, feat)

    # Row tile from a byte budget (not a fixed row count), dtype-aware sublane
    # alignment. ~2 MiB tiles -> ~8 MiB peak VMEM (2x in + 2x out tiles), safe
    # under the default scoped VMEM on v5e (16 MiB), v6e (32 MiB), v7x (32 MiB).
    row_bytes = max(feat * itemsize, 1)
    budget_rows = max(sublane,
                      (target_tile_bytes // row_bytes) // sublane * sublane)
    tile_rows = budget_rows
    # Prefer a multi-step grid (pipeline overlap + v7x dual-TC sharding) when
    # each step still moves a decent-sized tile.
    if tile_rows >= rows and rows > sublane and rows * row_bytes >= (2 << 20):
        tile_rows = _round_up(pl.cdiv(rows, 2), sublane)
    if tile_rows >= rows:
        tile_rows = rows  # block equals the full dim (always legal, no pad)

    # Ragged last block handled by Pallas: OOB reads are garbage but only feed
    # elementwise math whose out-of-range writes are masked off.
    grid = (pl.cdiv(rows, tile_rows),)

    cost = pl.CostEstimate(
        flops=2 * rows * feat,
        transcendentals=0,
        bytes_accessed=(2 * rows * feat + 2 * feat) * itemsize,
    )

    out = pl.pallas_call(
        denormalize_kernel,
        out_shape=jax.ShapeDtypeStruct((rows, feat), dtype),
        grid_spec=pltpu.PrefetchScalarGridSpec(
            num_scalar_prefetch=0,
            grid=grid,
            in_specs=[
                # x: tiled over the batch-row axis, pipelined by BlockSpec.
                pl.BlockSpec((tile_rows, feat), lambda i: (i, 0)),
                # std / mean: constant block index -> resident across steps.
                pl.BlockSpec((1, feat), lambda i: (0, 0)),
                pl.BlockSpec((1, feat), lambda i: (0, 0)),
            ],
            out_specs=pl.BlockSpec((tile_rows, feat), lambda i: (i, 0)),
        ),
        compiler_params=pltpu.CompilerParams(
            dimension_semantics=("parallel",)),
        cost_estimate=cost,
    )(x2, std2, mean2)

    return out.reshape(orig_shape)


if __name__ == "__main__":
    key = jax.random.PRNGKey(0)
    kx, ks, km = jax.random.split(key, 3)

    # Shapes consistent with the module: a batch of vectors of length `size`
    # plus the two learned parameter vectors of the same length.
    B, SIZE = 16, 256
    x = jax.random.normal(kx, (B, SIZE), jnp.float32)
    std = jax.random.uniform(ks, (SIZE,), jnp.float32, minval=0.5, maxval=2.0)
    mean = jax.random.normal(km, (SIZE,), jnp.float32)

    out = jax.jit(denormalize)(x, std, mean)
    jax.block_until_ready(out)
    np.testing.assert_allclose(np.asarray(out), np.asarray(x * std + mean),
                               rtol=1e-6, atol=1e-6)

    # Small non-multiple-of-128 feature size: exercises the lane-densifying
    # row-fold path (no padded copy of x).
    B2, SIZE2 = 24, 48
    x_s = jax.random.normal(kx, (B2, SIZE2), jnp.float32)
    std_s = jax.random.uniform(ks, (SIZE2,), jnp.float32, minval=0.5, maxval=2.0)
    mean_s = jax.random.normal(km, (SIZE2,), jnp.float32)
    out_s = jax.jit(denormalize)(x_s, std_s, mean_s)
    jax.block_until_ready(out_s)
    np.testing.assert_allclose(np.asarray(out_s),
                               np.asarray(x_s * std_s + mean_s),
                               rtol=1e-6, atol=1e-6)

    print("KERNEL_OK")
</pallas_src>

<mosaic_0001>
module attributes {stable_mosaic.version = 11 : i64} {
  func.func @denormalize_kernel(%arg0: i32, %arg1: memref<16x256xf32, #tpu.memory_space<vmem>>, %arg2: memref<1x256xf32, #tpu.memory_space<vmem>>, %arg3: memref<1x256xf32, #tpu.memory_space<vmem>>, %arg4: memref<16x256xf32, #tpu.memory_space<vmem>>) attributes {dimension_semantics = [#tpu.dimension_semantics<parallel>], iteration_bounds = array<i64: 1>, scalar_prefetch = 0 : i64, scratch_operands = 0 : i64, tpu.core_type = #tpu.core_type<tc>, window_params = [{transform_indices = @transform_0, window_bounds = array<i64: 16, 256>}, {pipeline_mode = #tpu.pipeline_mode<synchronous>, transform_indices = @transform_1, window_bounds = array<i64: 1, 256>}, {pipeline_mode = #tpu.pipeline_mode<synchronous>, transform_indices = @transform_2, window_bounds = array<i64: 1, 256>}, {transform_indices = @transform_3, window_bounds = array<i64: 16, 256>}]} {
    %c0 = arith.constant 0 : index
    %c0_0 = arith.constant 0 : index
    %0 = vector.load %arg1[%c0, %c0_0] : memref<16x256xf32, #tpu.memory_space<vmem>>, vector<16x256xf32>
    %c0_1 = arith.constant 0 : index
    %c0_2 = arith.constant 0 : index
    %1 = vector.load %arg2[%c0_1, %c0_2] : memref<1x256xf32, #tpu.memory_space<vmem>>, vector<1x256xf32>
    %2 = vector.broadcast %1 : vector<1x256xf32> to vector<16x256xf32>
    %3 = arith.mulf %0, %2 : vector<16x256xf32>
    %c0_3 = arith.constant 0 : index
    %c0_4 = arith.constant 0 : index
    %4 = vector.load %arg3[%c0_3, %c0_4] : memref<1x256xf32, #tpu.memory_space<vmem>>, vector<1x256xf32>
    %5 = vector.broadcast %4 : vector<1x256xf32> to vector<16x256xf32>
    %6 = arith.addf %3, %5 : vector<16x256xf32>
    %c0_5 = arith.constant 0 : index
    %c0_6 = arith.constant 0 : index
    %7 = vector.load %arg4[%c0_5, %c0_6] : memref<16x256xf32, #tpu.memory_space<vmem>>, vector<16x256xf32>
    tpu.vector_store %arg4[%c0_5, %c0_6], %6 {strides = array<i32>} : memref<16x256xf32, #tpu.memory_space<vmem>>, vector<16x256xf32>,
    return
  }
  func.func @transform_0(%arg0: i32) -> (i32, i32) {
    %c0_i32 = arith.constant 0 : i32
    %c0_i32_0 = arith.constant 0 : i32
    return %arg0, %c0_i32 : i32, i32
  }
  func.func @transform_1(%arg0: i32) -> (i32, i32) {
    %c0_i32 = arith.constant 0 : i32
    %c0_i32_0 = arith.constant 0 : i32
    %c0_i32_1 = arith.constant 0 : i32
    return %c0_i32, %c0_i32_0 : i32, i32
  }
  func.func @transform_2(%arg0: i32) -> (i32, i32) {
    %c0_i32 = arith.constant 0 : i32
    %c0_i32_0 = arith.constant 0 : i32
    %c0_i32_1 = arith.constant 0 : i32
    return %c0_i32, %c0_i32_0 : i32, i32
  }
  func.func @transform_3(%arg0: i32) -> (i32, i32) {
    %c0_i32 = arith.constant 0 : i32
    %c0_i32_0 = arith.constant 0 : i32
    return %arg0, %c0_i32 : i32, i32
  }
}

</mosaic_0001>

<llo_original>
// kernel: denormalize.1
$region0: #{denormalize.1}
  #allocation0 [shape = 'u32[]', space=smem, size = 0x4, offset = 0x4, fixed_abs, tag = 'smem constant byte address 0x4 - core index']
  #allocation1 [shape = 'u32[144,128]{1,0:T(1,128)}', space=vmem, size = 0x12000, scoped, tag = 'internal scratch']
  %s0 = inlined_call_operand.hbm [shape: f32[16,256], index: 0, kind: input, shape index: {}]
  %s1 = inlined_call_operand.vmem [shape: f32[1,256], index: 1, kind: input, shape index: {}]
  %s2 = inlined_call_operand.vmem [shape: f32[1,256], index: 2, kind: input, shape index: {}]
  %s3 = inlined_call_operand.hbm [shape: f32[16,256], index: 3, kind: output, shape index: {}]
  %s4 = sld [smem:[#allocation0]]
  $region26: #{denormalize.1} parent=0
    _
  %s6 = ssub.s32 1, %s4
  %s7 = scalar_select 0, %s6, %s4
  $region1: #{denormalize.1} parent=0
    #allocation2 [shape = 'u8[16384]{0}', space=vmem, size = 0x4000, scoped, tag = 'input window, operand 0, single buffered']
    #allocation3 [shape = 's32[1]{0}', space=sflag, size = 0x4, scoped, tag = 'scoped memory for denormalize.1']
    #allocation4 [shape = 's32[1]{0}', space=sflag, size = 0x4, scoped, tag = 'scoped memory for denormalize.1']
    #allocation5 [shape = 'u8[16384]{0}', space=vmem, size = 0x4000, scoped, tag = 'output window, operand 0, single buffered']
    %8 = vsyncpa [#allocation3], 0
    %9 = vsyncpa [#allocation4], 0
    // Predicated region
    $region2: #{denormalize.1} parent=1 // pred_check
      _
    $region3: #{denormalize.1} parent=1 // pred_check_branch
      %11 = sbr.rel (0) target = $region5
    $region4: #{denormalize.1} parent=1 // pred_region
      %s13 = ssub.s32 512, 512
      %14 = vsyncadd [#allocation3], %s13
      %s15 = sshll.u32 [#allocation2], 4
      %s16 = int_to_ptr.vmem [resolvable:$true] %s15
      %21 = dma.hbm_to_vmem [thread:$0]  %s0, 512, %s16, [#allocation3], 256, 256, 16
    $region5: #{denormalize.1} parent=1 // pred_fallthru
      _
    // Predicated region
    $region6: #{denormalize.1} parent=1 // pred_check
      _
    $region7: #{denormalize.1} parent=1 // pred_check_branch
      %23 = sbr.rel (0) target = $region9
    $region8: #{denormalize.1} parent=1 // pred_region
      _
    $region9: #{denormalize.1} parent=1 // pred_fallthru
      _
    // Predicated region
    $region10: #{denormalize.1} parent=1 // pred_check
      _
    $region11: #{denormalize.1} parent=1 // pred_check_branch
      %25 = sbr.rel (0) target = $region13
    $region12: #{denormalize.1} parent=1 // pred_region
      _
    $region13: #{denormalize.1} parent=1 // pred_fallthru
      _
    // Predicated region
    $region14: #{denormalize.1} parent=1 // pred_check
      _
    $region15: #{denormalize.1} parent=1 // pred_check_branch
      %27 = sbr.rel (0) target = $region17
    $region16: #{denormalize.1} parent=1 // pred_region
      %28 = dma.done [#allocation3], 512
    $region17: #{denormalize.1} parent=1 // pred_fallthru
      _
    %v29 = vld [vmem:[#allocation2] sm:$0xff]
    %v30 = vld [vmem:[#allocation2 + $0x8] sm:$0xff]
    %v31 = vld [vmem:[#allocation2 + $0x10] sm:$0xff]
    %v32 = vld [vmem:[#allocation2 + $0x18] sm:$0xff]
    %v33 = vld [vmem:[%s1] sm:$0x3]
    %v35 = vlaneseq
    %v36 = vshrl.u32 %v35, 7
    %v37 = vsub.s32 0, %v36
    %v38 = vrot.slane %v33, %v37
    %v39 = vlaneseq
    %v40 = vshrl.u32 %v39, 7
    %v41 = vsub.s32 1, %v40
    %v42 = vrot.slane %v33, %v41
    %v45 = vmul.f32 %v29, %v38
    %v46 = vmul.f32 %v30, %v42
    %v47 = vmul.f32 %v31, %v38
    %v48 = vmul.f32 %v32, %v42
    %v49 = vld [vmem:[%s2] sm:$0x3]
    %v51 = vlaneseq
    %v52 = vshrl.u32 %v51, 7
    %v53 = vsub.s32 0, %v52
    %v54 = vrot.slane %v49, %v53
    %v55 = vlaneseq
    %v56 = vshrl.u32 %v55, 7
    %v57 = vsub.s32 1, %v56
    %v58 = vrot.slane %v49, %v57
    %v61 = vadd.f32 %v45, %v54
    %v62 = vadd.f32 %v46, %v58
    %v63 = vadd.f32 %v47, %v54
    %v64 = vadd.f32 %v48, %v58
    %65 = vst [vmem:[#allocation5] sm:$0xff] %v61
    %66 = vst [vmem:[#allocation5 + $0x8] sm:$0xff] %v62
    %67 = vst [vmem:[#allocation5 + $0x10] sm:$0xff] %v63
    %68 = vst [vmem:[#allocation5 + $0x18] sm:$0xff] %v64
    // Predicated region
    $region18: #{denormalize.1} parent=1 // pred_check
      _
    $region19: #{denormalize.1} parent=1 // pred_check_branch
      %70 = sbr.rel (0) target = $region21
    $region20: #{denormalize.1} parent=1 // pred_region
      %s72 = ssub.s32 512, 512
      %73 = vsyncadd [#allocation4], %s72
      %s74 = sshll.u32 [#allocation5], 4
      %s75 = int_to_ptr.vmem [resolvable:$true] %s74
      %80 = dma.vmem_to_hbm [thread:$0]  %s75, 512, %s3, [#allocation4], 256, 256, 16
    $region21: #{denormalize.1} parent=1 // pred_fallthru
      _
    // Predicated region
    $region22: #{denormalize.1} parent=1 // pred_check
      _
    $region23: #{denormalize.1} parent=1 // pred_check_branch
      %82 = sbr.rel (0) target = $region25
    $region24: #{denormalize.1} parent=1 // pred_region
      %83 = dma.done [#allocation4], 512
    $region25: #{denormalize.1} parent=1 // pred_fallthru
      _
    %84 = vsyncpa [#allocation3], 1
    %85 = vsyncpa [#allocation4], 1

</llo_original>
